<compile_context>
chip_gen: v5e
topology: v5e:2x2
jax: 0.10.0
libtpu: 0.0.40
codegen_flags: <defaults>
</compile_context>

<pallas_src>
import functools

import jax
import jax.numpy as jnp
from jax import lax
from jax.experimental import pallas as pl
from jax.experimental.pallas import tpu as pltpu

STATE_DIM = 21            # env.observation_space.shape[0] = mv(1) + pv(20)
IN_DIM = STATE_DIM * 2    # LayerNorm / l1 input dim = 42 (process_history = 2)
H1, H2, OUT = 64, 32, 1
LN_EPS = 1e-5
DEFAULT_BLOCK_B = 2048    # batch tile target (rows); multiple of 128


def _round_up(x, m):
    return ((x + m - 1) // m) * m


def _value_kernel(x_ref, w1_ref, s_ref, b1_ref, w2_ref, b2_ref, w3_ref, b3_ref,
                  o_ref, *, matmul_dtype):
    x = x_ref[...]                                    # (TB, F) f32
    x_mm = x.astype(matmul_dtype)
    inv_f = jnp.float32(1.0 / IN_DIM)

    # ---- l1 with LayerNorm folded in: z_aug = x @ [gamma*W1 | 1] ----
    # Column H1 of the augmented weight is all-ones, so s1 = sum_f x_f rides
    # the same MXU matmul instead of an XLU lane reduction.
    z_aug = jnp.dot(x_mm, w1_ref[...],
                    preferred_element_type=jnp.float32)      # (TB, H1+1)
    s1 = z_aug[:, H1:H1 + 1]                                  # (TB, 1)
    z = z_aug[:, :H1]                                         # (TB, H1)

    # Sum of squares also on the MXU (no lane-reduce on the XLU).
    ones_col = jnp.ones((IN_DIM, OUT), matmul_dtype)          # (F, 1)
    s2 = jnp.dot((x * x).astype(matmul_dtype), ones_col,
                 preferred_element_type=jnp.float32)          # (TB, 1)

    mean = s1 * inv_f
    var = jnp.maximum(s2 * inv_f - mean * mean, 0.0)          # clamp >= 0
    inv = lax.rsqrt(var + LN_EPS)

    # h1 = relu(inv * (x @ W1' - mean * colsum(W1')) + b1')
    h = jnp.maximum(inv * (z - mean * s_ref[...]) + b1_ref[...], 0.0)  # (TB, H1)

    # ---- l2: Linear(64, 32) + ReLU ----
    h = jnp.maximum(
        jnp.dot(h.astype(matmul_dtype), w2_ref[...],
                preferred_element_type=jnp.float32) + b2_ref[...], 0.0)  # (TB, H2)

    # ---- l3: Linear(32, 1), transpose-free column output ----
    v = jnp.dot(h.astype(matmul_dtype), w3_ref[...],
                preferred_element_type=jnp.float32) + b3_ref[...]        # (TB, 1)
    o_ref[...] = v.astype(o_ref.dtype)


def _prepare_params(params, matmul_dtype):
    """Fold the LayerNorm affine into l1 and pre-cast MXU operands."""
    g, be, w1, b1, w2, b2, w3, b3 = params
    g = g.reshape(IN_DIM).astype(jnp.float32)
    be = be.reshape(1, IN_DIM).astype(jnp.float32)
    w1 = w1.astype(jnp.float32)

    w1p = g.reshape(IN_DIM, 1) * w1                           # diag(gamma) @ W1
    w1aug = jnp.concatenate(
        [w1p, jnp.ones((IN_DIM, 1), jnp.float32)], axis=1)    # (F, H1+1)
    s_row = jnp.sum(w1p, axis=0, keepdims=True)               # (1, H1)
    b1p = b1.reshape(1, H1).astype(jnp.float32) + be @ w1     # (1, H1)
    w3c = w3.reshape(OUT, H2).astype(jnp.float32).T           # (H2, 1)

    return (w1aug.astype(matmul_dtype), s_row, b1p,
            w2.astype(matmul_dtype), b2.reshape(1, H2).astype(jnp.float32),
            w3c.astype(matmul_dtype), b3.reshape(1, OUT).astype(jnp.float32))


def value_forward(state, params, *, block_b=DEFAULT_BLOCK_B,
                  matmul_dtype=jnp.bfloat16):
    """state: (B, H, state_dim) or (B, F). Returns (B, 1) float32."""
    B = state.shape[0]
    x = state.reshape(B, -1).astype(jnp.float32)     # torch.flatten(state, 1, -1)
    assert x.shape[1] == IN_DIM, f"expected flattened dim {IN_DIM}, got {x.shape[1]}"

    w1aug, s_row, b1p, w2, b2, w3, b3 = _prepare_params(params, matmul_dtype)

    # --- batch tiling: pad only to a multiple of 128; bound padding waste;
    #     keep >= 2 grid steps when possible so v7x can use both TensorCores.
    b128 = _round_up(B, 128)
    m = b128 // 128                                  # 128-row chunks
    cap = max(1, block_b // 128)                     # max chunks per tile
    n_blocks = max(-(-m // cap), 2 if m >= 2 else 1)
    d = -(-m // n_blocks)                            # chunks per tile (ceil)
    tb = 128 * d
    b_pad = tb * n_blocks
    if b_pad != B:
        x = jnp.pad(x, ((0, b_pad - B), (0, 0)))

    kernel = functools.partial(_value_kernel, matmul_dtype=matmul_dtype)

    # Weights: resident in VMEM (constant block index, fetched once).
    resident = lambda a: pl.BlockSpec(a.shape, lambda i: (0,) * a.ndim)

    flops = (2 * b_pad * (IN_DIM * (H1 + 1) + IN_DIM * OUT + H1 * H2 + H2 * OUT)
             + 12 * b_pad * H1)
    param_bytes = sum(int(p.size) * p.dtype.itemsize
                      for p in (w1aug, s_row, b1p, w2, b2, w3, b3))
    bytes_accessed = b_pad * IN_DIM * 4 + b_pad * 4 + param_bytes

    out = pl.pallas_call(
        kernel,
        out_shape=jax.ShapeDtypeStruct((b_pad, OUT), jnp.float32),
        grid=(n_blocks,),
        in_specs=[
            pl.BlockSpec((tb, IN_DIM), lambda i: (i, 0)),   # x: tiled over batch
            resident(w1aug), resident(s_row), resident(b1p),
            resident(w2), resident(b2),
            resident(w3), resident(b3),
        ],
        out_specs=pl.BlockSpec((tb, OUT), lambda i: (i, 0)),
        compiler_params=pltpu.CompilerParams(
            dimension_semantics=("parallel",)),
        cost_estimate=pl.CostEstimate(
            flops=flops, transcendentals=b_pad, bytes_accessed=bytes_accessed),
    )(x, w1aug, s_row, b1p, w2, b2, w3, b3)

    return out[:B]


def init_params(key):
    """Deterministic init mirroring PyTorch defaults.

    LayerNorm: gamma=1, beta=0.
    Linear(in, out): weight, bias ~ U(-1/sqrt(in), 1/sqrt(in)).
    w1, w2 stored (in, out) for row-major `x @ W`; w3 stored torch-native
    (out, in) = (1, 32).
    """
    ks = jax.random.split(key, 6)

    def lin(kw, kb, n_in, shape_w, shape_b):
        bound = 1.0 / jnp.sqrt(jnp.float32(n_in))
        w = jax.random.uniform(kw, shape_w, jnp.float32, -bound, bound)
        b = jax.random.uniform(kb, shape_b, jnp.float32, -bound, bound)
        return w, b

    gamma = jnp.ones((IN_DIM,), jnp.float32)
    beta = jnp.zeros((IN_DIM,), jnp.float32)
    w1, b1 = lin(ks[0], ks[1], IN_DIM, (IN_DIM, H1), (1, H1))
    w2, b2 = lin(ks[2], ks[3], H1, (H1, H2), (1, H2))
    w3, b3 = lin(ks[4], ks[5], H2, (OUT, H2), (1, OUT))   # torch layout (out,in)
    return (gamma, beta, w1, b1, w2, b2, w3, b3)


def value_reference(state, params):
    """Pure-JAX reference (two-pass LayerNorm) for correctness cross-checks."""
    g, be, w1, b1, w2, b2, w3, b3 = params
    x = state.reshape(state.shape[0], -1).astype(jnp.float32)
    mean = jnp.mean(x, axis=-1, keepdims=True)
    var = jnp.mean((x - mean) ** 2, axis=-1, keepdims=True)
    sa = (x - mean) * lax.rsqrt(var + LN_EPS) * g.reshape(1, -1) + be.reshape(1, -1)
    v = jnp.maximum(sa @ w1 + b1, 0.0)
    v = jnp.maximum(v @ w2 + b2, 0.0)
    return v @ w3.reshape(OUT, H2).T + b3


if __name__ == "__main__":
    key = jax.random.PRNGKey(0)
    k_param, k_g, k_b, k_state, k_big = jax.random.split(key, 5)

    params = init_params(k_param)
    # Non-trivial LayerNorm affine so the W1-folding path is actually exercised.
    gamma = 1.0 + 0.2 * jax.random.normal(k_g, (IN_DIM,), jnp.float32)
    beta = 0.1 * jax.random.normal(k_b, (IN_DIM,), jnp.float32)
    params = (gamma, beta) + params[2:]

    # Primary (small) test: state (batch=2, process_history=2, state_dim=21).
    state = jax.random.normal(k_state, (2, 2, STATE_DIM), jnp.float32)
    ref = value_reference(state, params)

    # f32 MXU path: tight check of the folded-LN / MXU-stats math.
    out_f32 = jax.block_until_ready(
        value_forward(state, params, matmul_dtype=jnp.float32))
    assert out_f32.shape == (2, 1), out_f32.shape
    assert jnp.allclose(out_f32, ref, atol=1e-3, rtol=1e-3), (out_f32, ref)

    # Default bf16 MXU path (looser tolerance vs. f32 reference).
    out = jax.block_until_ready(value_forward(state, params))
    assert out.shape == (2, 1), out.shape
    assert jnp.allclose(out, ref, atol=3e-2, rtol=3e-2), (out, ref)

    # Secondary test: multi-tile grid + batch padding path.
    state_big = jax.random.normal(k_big, (1500, 2, STATE_DIM), jnp.float32)
    ref_big = value_reference(state_big, params)

    out_big_f32 = jax.block_until_ready(
        value_forward(state_big, params, block_b=512, matmul_dtype=jnp.float32))
    assert out_big_f32.shape == (1500, 1), out_big_f32.shape
    assert jnp.allclose(out_big_f32, ref_big, atol=1e-3, rtol=1e-3)

    out_big = jax.block_until_ready(value_forward(state_big, params))
    assert out_big.shape == (1500, 1), out_big.shape
    assert jnp.allclose(out_big, ref_big, atol=3e-2, rtol=3e-2)

    print("KERNEL_OK")
</pallas_src>

<mosaic_0001>
module attributes {stable_mosaic.version = 11 : i64} {
  func.func @_value_kernel(%arg0: i32, %arg1: memref<128x42xf32, #tpu.memory_space<vmem>>, %arg2: memref<42x65xf32, #tpu.memory_space<vmem>>, %arg3: memref<1x64xf32, #tpu.memory_space<vmem>>, %arg4: memref<1x64xf32, #tpu.memory_space<vmem>>, %arg5: memref<64x32xf32, #tpu.memory_space<vmem>>, %arg6: memref<1x32xf32, #tpu.memory_space<vmem>>, %arg7: memref<32x1xf32, #tpu.memory_space<vmem>>, %arg8: memref<1x1xf32, #tpu.memory_space<vmem>>, %arg9: memref<128x1xf32, #tpu.memory_space<vmem>>) attributes {dimension_semantics = [#tpu.dimension_semantics<parallel>], iteration_bounds = array<i64: 1>, scalar_prefetch = 0 : i64, scratch_operands = 0 : i64, tpu.core_type = #tpu.core_type<tc>, window_params = [{transform_indices = @transform_0, window_bounds = array<i64: 128, 42>}, {pipeline_mode = #tpu.pipeline_mode<synchronous>, transform_indices = @transform_1, window_bounds = array<i64: 42, 65>}, {pipeline_mode = #tpu.pipeline_mode<synchronous>, transform_indices = @transform_2, window_bounds = array<i64: 1, 64>}, {pipeline_mode = #tpu.pipeline_mode<synchronous>, transform_indices = @transform_3, window_bounds = array<i64: 1, 64>}, {pipeline_mode = #tpu.pipeline_mode<synchronous>, transform_indices = @transform_4, window_bounds = array<i64: 64, 32>}, {pipeline_mode = #tpu.pipeline_mode<synchronous>, transform_indices = @transform_5, window_bounds = array<i64: 1, 32>}, {pipeline_mode = #tpu.pipeline_mode<synchronous>, transform_indices = @transform_6, window_bounds = array<i64: 32, 1>}, {pipeline_mode = #tpu.pipeline_mode<synchronous>, transform_indices = @transform_7, window_bounds = array<i64: 1, 1>}, {transform_indices = @transform_8, window_bounds = array<i64: 128, 1>}]} {
    %c0 = arith.constant 0 : index
    %c0_0 = arith.constant 0 : index
    %0 = vector.load %arg1[%c0, %c0_0] : memref<128x42xf32, #tpu.memory_space<vmem>>, vector<128x42xf32>
    %c0_1 = arith.constant 0 : index
    %c0_2 = arith.constant 0 : index
    %1 = vector.load %arg2[%c0_1, %c0_2] : memref<42x65xf32, #tpu.memory_space<vmem>>, vector<42x65xf32>
    %cst = arith.constant dense<0.000000e+00> : vector<128x65xf32>
    %2 = tpu.matmul %0, %1, %cst {dimension_numbers = #tpu.dot_dimension_numbers<[1], [0], [0], [1], [0, 0, 1, 1], [], []>} : vector<128x42xf32>, vector<42x65xf32>, vector<128x65xf32> -> vector<128x65xf32>
    %3 = vector.extract_strided_slice %2 {offsets = [0, 64], sizes = [128, 1], strides = [1, 1]} : vector<128x65xf32> to vector<128x1xf32>
    %4 = vector.extract_strided_slice %2 {offsets = [0, 0], sizes = [128, 64], strides = [1, 1]} : vector<128x65xf32> to vector<128x64xf32>
    %cst_3 = arith.constant 1.000000e+00 : f32
    %5 = vector.broadcast %cst_3 : f32 to vector<42x1xf32>
    %6 = arith.mulf %0, %0 : vector<128x42xf32>
    %cst_4 = arith.constant dense<0.000000e+00> : vector<128x1xf32>
    %7 = tpu.matmul %6, %5, %cst_4 {dimension_numbers = #tpu.dot_dimension_numbers<[1], [0], [0], [1], [0, 0, 1, 1], [], []>} : vector<128x42xf32>, vector<42x1xf32>, vector<128x1xf32> -> vector<128x1xf32>
    %cst_5 = arith.constant 0.0238095243 : f32
    %8 = vector.broadcast %cst_5 : f32 to vector<128x1xf32>
    %9 = arith.mulf %3, %8 : vector<128x1xf32>
    %cst_6 = arith.constant 0.0238095243 : f32
    %10 = vector.broadcast %cst_6 : f32 to vector<128x1xf32>
    %11 = arith.mulf %7, %10 : vector<128x1xf32>
    %12 = arith.mulf %9, %9 : vector<128x1xf32>
    %13 = arith.subf %11, %12 : vector<128x1xf32>
    %cst_7 = arith.constant 0.000000e+00 : f32
    %14 = vector.broadcast %cst_7 : f32 to vector<128x1xf32>
    %15 = arith.maximumf %13, %14 : vector<128x1xf32>
    %cst_8 = arith.constant 9.99999974E-6 : f32
    %16 = vector.broadcast %cst_8 : f32 to vector<128x1xf32>
    %17 = arith.addf %15, %16 : vector<128x1xf32>
    %18 = math.rsqrt %17 : vector<128x1xf32>
    %c0_9 = arith.constant 0 : index
    %c0_10 = arith.constant 0 : index
    %19 = vector.load %arg3[%c0_9, %c0_10] : memref<1x64xf32, #tpu.memory_space<vmem>>, vector<1x64xf32>
    %20 = vector.broadcast %9 : vector<128x1xf32> to vector<128x64xf32>
    %21 = vector.broadcast %19 : vector<1x64xf32> to vector<128x64xf32>
    %22 = arith.mulf %20, %21 : vector<128x64xf32>
    %23 = arith.subf %4, %22 : vector<128x64xf32>
    %24 = vector.broadcast %18 : vector<128x1xf32> to vector<128x64xf32>
    %25 = arith.mulf %24, %23 : vector<128x64xf32>
    %c0_11 = arith.constant 0 : index
    %c0_12 = arith.constant 0 : index
    %26 = vector.load %arg4[%c0_11, %c0_12] : memref<1x64xf32, #tpu.memory_space<vmem>>, vector<1x64xf32>
    %27 = vector.broadcast %26 : vector<1x64xf32> to vector<128x64xf32>
    %28 = arith.addf %25, %27 : vector<128x64xf32>
    %cst_13 = arith.constant 0.000000e+00 : f32
    %29 = vector.broadcast %cst_13 : f32 to vector<128x64xf32>
    %30 = arith.maximumf %28, %29 : vector<128x64xf32>
    %c0_14 = arith.constant 0 : index
    %c0_15 = arith.constant 0 : index
    %31 = vector.load %arg5[%c0_14, %c0_15] : memref<64x32xf32, #tpu.memory_space<vmem>>, vector<64x32xf32>
    %cst_16 = arith.constant dense<0.000000e+00> : vector<128x32xf32>
    %32 = tpu.matmul %30, %31, %cst_16 {dimension_numbers = #tpu.dot_dimension_numbers<[1], [0], [0], [1], [0, 0, 1, 1], [], []>} : vector<128x64xf32>, vector<64x32xf32>, vector<128x32xf32> -> vector<128x32xf32>
    %c0_17 = arith.constant 0 : index
    %c0_18 = arith.constant 0 : index
    %33 = vector.load %arg6[%c0_17, %c0_18] : memref<1x32xf32, #tpu.memory_space<vmem>>, vector<1x32xf32>
    %34 = vector.broadcast %33 : vector<1x32xf32> to vector<128x32xf32>
    %35 = arith.addf %32, %34 : vector<128x32xf32>
    %cst_19 = arith.constant 0.000000e+00 : f32
    %36 = vector.broadcast %cst_19 : f32 to vector<128x32xf32>
    %37 = arith.maximumf %35, %36 : vector<128x32xf32>
    %c0_20 = arith.constant 0 : index
    %c0_21 = arith.constant 0 : index
    %38 = vector.load %arg7[%c0_20, %c0_21] : memref<32x1xf32, #tpu.memory_space<vmem>>, vector<32x1xf32>
    %cst_22 = arith.constant dense<0.000000e+00> : vector<128x1xf32>
    %39 = tpu.matmul %37, %38, %cst_22 {dimension_numbers = #tpu.dot_dimension_numbers<[1], [0], [0], [1], [0, 0, 1, 1], [], []>} : vector<128x32xf32>, vector<32x1xf32>, vector<128x1xf32> -> vector<128x1xf32>
    %c0_23 = arith.constant 0 : index
    %c0_24 = arith.constant 0 : index
    %40 = vector.load %arg8[%c0_23, %c0_24] : memref<1x1xf32, #tpu.memory_space<vmem>>, vector<1x1xf32>
    %41 = vector.broadcast %40 : vector<1x1xf32> to vector<128x1xf32>
    %42 = arith.addf %39, %41 : vector<128x1xf32>
    %c0_25 = arith.constant 0 : index
    %c0_26 = arith.constant 0 : index
    %43 = vector.load %arg9[%c0_25, %c0_26] : memref<128x1xf32, #tpu.memory_space<vmem>>, vector<128x1xf32>
    tpu.vector_store %arg9[%c0_25, %c0_26], %42 {strides = array<i32>} : memref<128x1xf32, #tpu.memory_space<vmem>>, vector<128x1xf32>,
    return
  }
  func.func @transform_0(%arg0: i32) -> (i32, i32) {
    %c0_i32 = arith.constant 0 : i32
    %c0_i32_0 = arith.constant 0 : i32
    return %arg0, %c0_i32 : i32, i32
  }
  func.func @transform_1(%arg0: i32) -> (i32, i32) {
    %c0_i32 = arith.constant 0 : i32
    %c0_i32_0 = arith.constant 0 : i32
    %c0_i32_1 = arith.constant 0 : i32
    return %c0_i32, %c0_i32_0 : i32, i32
  }
  func.func @transform_2(%arg0: i32) -> (i32, i32) {
    %c0_i32 = arith.constant 0 : i32
    %c0_i32_0 = arith.constant 0 : i32
    %c0_i32_1 = arith.constant 0 : i32
    return %c0_i32, %c0_i32_0 : i32, i32
  }
  func.func @transform_3(%arg0: i32) -> (i32, i32) {
    %c0_i32 = arith.constant 0 : i32
    %c0_i32_0 = arith.constant 0 : i32
    %c0_i32_1 = arith.constant 0 : i32
    return %c0_i32, %c0_i32_0 : i32, i32
  }
  func.func @transform_4(%arg0: i32) -> (i32, i32) {
    %c0_i32 = arith.constant 0 : i32
    %c0_i32_0 = arith.constant 0 : i32
    %c0_i32_1 = arith.constant 0 : i32
    return %c0_i32, %c0_i32_0 : i32, i32
  }
  func.func @transform_5(%arg0: i32) -> (i32, i32) {
    %c0_i32 = arith.constant 0 : i32
    %c0_i32_0 = arith.constant 0 : i32
    %c0_i32_1 = arith.constant 0 : i32
    return %c0_i32, %c0_i32_0 : i32, i32
  }
  func.func @transform_6(%arg0: i32) -> (i32, i32) {
    %c0_i32 = arith.constant 0 : i32
    %c0_i32_0 = arith.constant 0 : i32
    %c0_i32_1 = arith.constant 0 : i32
    return %c0_i32, %c0_i32_0 : i32, i32
  }
  func.func @transform_7(%arg0: i32) -> (i32, i32) {
    %c0_i32 = arith.constant 0 : i32
    %c0_i32_0 = arith.constant 0 : i32
    %c0_i32_1 = arith.constant 0 : i32
    return %c0_i32, %c0_i32_0 : i32, i32
  }
  func.func @transform_8(%arg0: i32) -> (i32, i32) {
    %c0_i32 = arith.constant 0 : i32
    %c0_i32_0 = arith.constant 0 : i32
    return %arg0, %c0_i32 : i32, i32
  }
}

</mosaic_0001>

<llo_original>
// kernel: tpu_custom_call.1
$region0: #{tpu_custom_call.1}
  #allocation0 [shape = 'u32[]', space=smem, size = 0x4, offset = 0x4, fixed_abs, tag = 'smem constant byte address 0x4 - core index']
  #allocation1 [shape = 'u32[72,128]{1,0:T(1,128)}', space=vmem, size = 0x9000, scoped, tag = 'internal scratch']
  #allocation2 [shape = 'f32[1,1]{1,0:T(1,128)S(1)}', space=vmem, size = 0x200, scoped, tag = 'scoped memory for tpu_custom_call.1']
  %s0 = inlined_call_operand.vmem [shape: f32[128,42], index: 0, kind: input, shape index: {}]
  %s1 = inlined_call_operand.vmem [shape: f32[42,65], index: 1, kind: input, shape index: {}]
  %s2 = inlined_call_operand.vmem [shape: f32[1,64], index: 2, kind: input, shape index: {}]
  %s3 = inlined_call_operand.vmem [shape: f32[1,64], index: 3, kind: input, shape index: {}]
  %s4 = inlined_call_operand.vmem [shape: f32[64,32], index: 4, kind: input, shape index: {}]
  %s5 = inlined_call_operand.vmem [shape: f32[1,32], index: 5, kind: input, shape index: {}]
  %s6 = inlined_call_operand.vmem [shape: f32[32,1], index: 6, kind: input, shape index: {}]
  %s7 = inlined_call_operand.<no memory space> [shape: f32[1,1], index: 7, kind: input, shape index: {}]
  %s8 = inlined_call_operand.vmem [shape: f32[128,1], index: 8, kind: output, shape index: {}]
  %s9 = sld [smem:[#allocation0]]
  $region42: #{tpu_custom_call.1} parent=0
    _
  %s11 = ssub.s32 1, %s9
  %s12 = scalar_select 0, %s11, %s9
  %v13 = vstv %s7
  %14 = vst [vmem:[#allocation2] sm:$0x1] %v13
  // Predicated region
  $region2: #{tpu_custom_call.1} parent=0 // pred_check
    _
  $region3: #{tpu_custom_call.1} parent=0 // pred_check_branch
    %16 = sbr.rel (0) target = $region5
  $region4: #{tpu_custom_call.1} parent=0 // pred_region
    _
  $region5: #{tpu_custom_call.1} parent=0 // pred_fallthru
    _
  // Predicated region
  $region6: #{tpu_custom_call.1} parent=0 // pred_check
    _
  $region7: #{tpu_custom_call.1} parent=0 // pred_check_branch
    %18 = sbr.rel (0) target = $region9
  $region8: #{tpu_custom_call.1} parent=0 // pred_region
    _
  $region9: #{tpu_custom_call.1} parent=0 // pred_fallthru
    _
  // Predicated region
  $region10: #{tpu_custom_call.1} parent=0 // pred_check
    _
  $region11: #{tpu_custom_call.1} parent=0 // pred_check_branch
    %20 = sbr.rel (0) target = $region13
  $region12: #{tpu_custom_call.1} parent=0 // pred_region
    _
  $region13: #{tpu_custom_call.1} parent=0 // pred_fallthru
    _
  // Predicated region
  $region14: #{tpu_custom_call.1} parent=0 // pred_check
    _
  $region15: #{tpu_custom_call.1} parent=0 // pred_check_branch
    %22 = sbr.rel (0) target = $region17
  $region16: #{tpu_custom_call.1} parent=0 // pred_region
    _
  $region17: #{tpu_custom_call.1} parent=0 // pred_fallthru
    _
  // Predicated region
  $region18: #{tpu_custom_call.1} parent=0 // pred_check
    _
  $region19: #{tpu_custom_call.1} parent=0 // pred_check_branch
    %24 = sbr.rel (0) target = $region21
  $region20: #{tpu_custom_call.1} parent=0 // pred_region
    _
  $region21: #{tpu_custom_call.1} parent=0 // pred_fallthru
    _
  // Predicated region
  $region22: #{tpu_custom_call.1} parent=0 // pred_check
    _
  $region23: #{tpu_custom_call.1} parent=0 // pred_check_branch
    %26 = sbr.rel (0) target = $region25
  $region24: #{tpu_custom_call.1} parent=0 // pred_region
    _
  $region25: #{tpu_custom_call.1} parent=0 // pred_fallthru
    _
  // Predicated region
  $region26: #{tpu_custom_call.1} parent=0 // pred_check
    _
  $region27: #{tpu_custom_call.1} parent=0 // pred_check_branch
    %28 = sbr.rel (0) target = $region29
  $region28: #{tpu_custom_call.1} parent=0 // pred_region
    _
  $region29: #{tpu_custom_call.1} parent=0 // pred_fallthru
    _
  // Predicated region
  $region30: #{tpu_custom_call.1} parent=0 // pred_check
    _
  $region31: #{tpu_custom_call.1} parent=0 // pred_check_branch
    %30 = sbr.rel (0) target = $region33
  $region32: #{tpu_custom_call.1} parent=0 // pred_region
    _
  $region33: #{tpu_custom_call.1} parent=0 // pred_fallthru
    _
  %v31 = vld [vmem:[%s0] sm:$0xff]
  %v32 = vld [vmem:[%s0 + $0x8] sm:$0xff]
  %v33 = vld [vmem:[%s0 + $0x10] sm:$0xff]
  %v34 = vld [vmem:[%s0 + $0x18] sm:$0xff]
  %v35 = vld [vmem:[%s0 + $0x20] sm:$0xff]
  %v36 = vld [vmem:[%s0 + $0x28] sm:$0xff]
  %v37 = vld [vmem:[%s0 + $0x30] sm:$0xff]
  %v38 = vld [vmem:[%s0 + $0x38] sm:$0xff]
  %v39 = vld [vmem:[%s0 + $0x40] sm:$0xff]
  %v40 = vld [vmem:[%s0 + $0x48] sm:$0xff]
  %v41 = vld [vmem:[%s0 + $0x50] sm:$0xff]
  %v42 = vld [vmem:[%s0 + $0x58] sm:$0xff]
  %v43 = vld [vmem:[%s0 + $0x60] sm:$0xff]
  %v44 = vld [vmem:[%s0 + $0x68] sm:$0xff]
  %v45 = vld [vmem:[%s0 + $0x70] sm:$0xff]
  %v46 = vld [vmem:[%s0 + $0x78] sm:$0xff]
  %v47 = vld [vmem:[%s1] sm:$0xff]
  %v48 = vld [vmem:[%s1 + $0x8] sm:$0xff]
  %v49 = vld [vmem:[%s1 + $0x10] sm:$0xff]
  %v50 = vld [vmem:[%s1 + $0x18] sm:$0xff]
  %v51 = vld [vmem:[%s1 + $0x20] sm:$0xff]
  %v52 = vld [vmem:[%s1 + $0x28] sm:$0x3]
  %vm53 = vcmask 343040
  %v55 = vsel %vm53, %v31, 0
  %v58 = vsel %vm53, %v32, 0
  %v61 = vsel %vm53, %v33, 0
  %v64 = vsel %vm53, %v34, 0
  %v67 = vsel %vm53, %v35, 0
  %v70 = vsel %vm53, %v36, 0
  %v73 = vsel %vm53, %v37, 0
  %v76 = vsel %vm53, %v38, 0
  %v79 = vsel %vm53, %v39, 0
  %v82 = vsel %vm53, %v40, 0
  %v85 = vsel %vm53, %v41, 0
  %v88 = vsel %vm53, %v42, 0
  %v91 = vsel %vm53, %v43, 0
  %v94 = vsel %vm53, %v44, 0
  %v97 = vsel %vm53, %v45, 0
  %v100 = vsel %vm53, %v46, 0
  %vm102 = vcmask 1041408
  %v104 = vsel %vm102, %v52, 0
  %106 = vmatpush.msra.mxu0 0.0
  %107 = vmatpush.msra.mxu0 0.0
  %108 = vmatpush.msra.mxu0 0.0
  %109 = vmatpush.msra.mxu0 0.0
  %110 = vmatpush.msra.mxu0 0.0
  %111 = vmatpush.msra.mxu0 0.0
  %112 = vmatpush.msra.mxu0 0.0
  %113 = vmatpush.msra.mxu0 0.0
  %114 = vmatpush.msra.mxu0 0.0
  %115 = vmatpush.msra.mxu0 0.0
  %116 = vmatpush.msra.mxu0 %v104
  %117 = vmatpush.msra.mxu0 %v51
  %118 = vmatpush.msra.mxu0 %v50
  %119 = vmatpush.msra.mxu0 %v49
  %120 = vmatpush.msra.mxu0 %v48
  %121 = vmatpush.msra.mxu0 %v47
  %122 = vmatmul.f32.gmra.mxu0 %v55
  %v123 = vpop.f32.mrf.mxu0
  %v124 = vadd.f32 0.0, %v123
  %125 = vmatmul.f32.gmra.mxu0 %v58
  %v126 = vpop.f32.mrf.mxu0
  %v127 = vadd.f32 0.0, %v126
  %128 = vmatmul.f32.gmra.mxu0 %v61
  %v129 = vpop.f32.mrf.mxu0
  %v130 = vadd.f32 0.0, %v129
  %131 = vmatmul.f32.gmra.mxu0 %v64
  %v132 = vpop.f32.mrf.mxu0
  %v133 = vadd.f32 0.0, %v132
  %134 = vmatmul.f32.gmra.mxu0 %v67
  %v135 = vpop.f32.mrf.mxu0
  %v136 = vadd.f32 0.0, %v135
  %137 = vmatmul.f32.gmra.mxu0 %v70
  %v138 = vpop.f32.mrf.mxu0
  %v139 = vadd.f32 0.0, %v138
  %140 = vmatmul.f32.gmra.mxu0 %v73
  %v141 = vpop.f32.mrf.mxu0
  %v142 = vadd.f32 0.0, %v141
  %143 = vmatmul.f32.gmra.mxu0 %v76
  %v144 = vpop.f32.mrf.mxu0
  %v145 = vadd.f32 0.0, %v144
  %146 = vmatmul.f32.gmra.mxu0 %v79
  %v147 = vpop.f32.mrf.mxu0
  %v148 = vadd.f32 0.0, %v147
  %149 = vmatmul.f32.gmra.mxu0 %v82
  %v150 = vpop.f32.mrf.mxu0
  %v151 = vadd.f32 0.0, %v150
  %152 = vmatmul.f32.gmra.mxu0 %v85
  %v153 = vpop.f32.mrf.mxu0
  %v154 = vadd.f32 0.0, %v153
  %155 = vmatmul.f32.gmra.mxu0 %v88
  %v156 = vpop.f32.mrf.mxu0
  %v157 = vadd.f32 0.0, %v156
  %158 = vmatmul.f32.gmra.mxu0 %v91
  %v159 = vpop.f32.mrf.mxu0
  %v160 = vadd.f32 0.0, %v159
  %161 = vmatmul.f32.gmra.mxu0 %v94
  %v162 = vpop.f32.mrf.mxu0
  %v163 = vadd.f32 0.0, %v162
  %164 = vmatmul.f32.gmra.mxu0 %v97
  %v165 = vpop.f32.mrf.mxu0
  %v166 = vadd.f32 0.0, %v165
  %167 = vmatmul.f32.gmra.mxu0 %v100
  %v168 = vpop.f32.mrf.mxu0
  %v169 = vadd.f32 0.0, %v168
  %170 = vdwg.mxu0
  %v171 = vmul.f32 %v31, %v31
  %v172 = vmul.f32 %v32, %v32
  %v173 = vmul.f32 %v33, %v33
  %v174 = vmul.f32 %v34, %v34
  %v175 = vmul.f32 %v35, %v35
  %v176 = vmul.f32 %v36, %v36
  %v177 = vmul.f32 %v37, %v37
  %v178 = vmul.f32 %v38, %v38
  %v179 = vmul.f32 %v39, %v39
  %v180 = vmul.f32 %v40, %v40
  %v181 = vmul.f32 %v41, %v41
  %v182 = vmul.f32 %v42, %v42
  %v183 = vmul.f32 %v43, %v43
  %v184 = vmul.f32 %v44, %v44
  %v185 = vmul.f32 %v45, %v45
  %v186 = vmul.f32 %v46, %v46
  %v188 = vsel %vm53, %v171, 0
  %v191 = vsel %vm53, %v172, 0
  %v194 = vsel %vm53, %v173, 0
  %v197 = vsel %vm53, %v174, 0
  %v200 = vsel %vm53, %v175, 0
  %v203 = vsel %vm53, %v176, 0
  %v206 = vsel %vm53, %v177, 0
  %v209 = vsel %vm53, %v178, 0
  %v212 = vsel %vm53, %v179, 0
  %v215 = vsel %vm53, %v180, 0
  %v218 = vsel %vm53, %v181, 0
  %v221 = vsel %vm53, %v182, 0
  %v224 = vsel %vm53, %v183, 0
  %v227 = vsel %vm53, %v184, 0
  %v230 = vsel %vm53, %v185, 0
  %v233 = vsel %vm53, %v186, 0
  %v236 = vsel %vm102, 1.0, 0
  %238 = vmatpush.msra.mxu0 0.0
  %239 = vmatpush.msra.mxu0 0.0
  %240 = vmatpush.msra.mxu0 0.0
  %241 = vmatpush.msra.mxu0 0.0
  %242 = vmatpush.msra.mxu0 0.0
  %243 = vmatpush.msra.mxu0 0.0
  %244 = vmatpush.msra.mxu0 0.0
  %245 = vmatpush.msra.mxu0 0.0
  %246 = vmatpush.msra.mxu0 0.0
  %247 = vmatpush.msra.mxu0 0.0
  %248 = vmatpush.msra.mxu0 %v236
  %249 = vmatpush.msra.mxu0 1.0
  %250 = vmatpush.msra.mxu0 1.0
  %251 = vmatpush.msra.mxu0 1.0
  %252 = vmatpush.msra.mxu0 1.0
  %253 = vmatpush.msra.mxu0 1.0
  %254 = vmatmul.f32.gmra.mxu0 %v188
  %v255 = vpop.f32.mrf.mxu0
  %v256 = vadd.f32 0.0, %v255
  %257 = vmatmul.f32.gmra.mxu0 %v191
  %v258 = vpop.f32.mrf.mxu0
  %v259 = vadd.f32 0.0, %v258
  %260 = vmatmul.f32.gmra.mxu0 %v194
  %v261 = vpop.f32.mrf.mxu0
  %v262 = vadd.f32 0.0, %v261
  %263 = vmatmul.f32.gmra.mxu0 %v197
  %v264 = vpop.f32.mrf.mxu0
  %v265 = vadd.f32 0.0, %v264
  %266 = vmatmul.f32.gmra.mxu0 %v200
  %v267 = vpop.f32.mrf.mxu0
  %v268 = vadd.f32 0.0, %v267
  %269 = vmatmul.f32.gmra.mxu0 %v203
  %v270 = vpop.f32.mrf.mxu0
  %v271 = vadd.f32 0.0, %v270
  %272 = vmatmul.f32.gmra.mxu0 %v206
  %v273 = vpop.f32.mrf.mxu0
  %v274 = vadd.f32 0.0, %v273
  %275 = vmatmul.f32.gmra.mxu0 %v209
  %v276 = vpop.f32.mrf.mxu0
  %v277 = vadd.f32 0.0, %v276
  %278 = vmatmul.f32.gmra.mxu0 %v212
  %v279 = vpop.f32.mrf.mxu0
  %v280 = vadd.f32 0.0, %v279
  %281 = vmatmul.f32.gmra.mxu0 %v215
  %v282 = vpop.f32.mrf.mxu0
  %v283 = vadd.f32 0.0, %v282
  %284 = vmatmul.f32.gmra.mxu0 %v218
  %v285 = vpop.f32.mrf.mxu0
  %v286 = vadd.f32 0.0, %v285
  %287 = vmatmul.f32.gmra.mxu0 %v221
  %v288 = vpop.f32.mrf.mxu0
  %v289 = vadd.f32 0.0, %v288
  %290 = vmatmul.f32.gmra.mxu0 %v224
  %v291 = vpop.f32.mrf.mxu0
  %v292 = vadd.f32 0.0, %v291
  %293 = vmatmul.f32.gmra.mxu0 %v227
  %v294 = vpop.f32.mrf.mxu0
  %v295 = vadd.f32 0.0, %v294
  %296 = vmatmul.f32.gmra.mxu0 %v230
  %v297 = vpop.f32.mrf.mxu0
  %v298 = vadd.f32 0.0, %v297
  %299 = vmatmul.f32.gmra.mxu0 %v233
  %v300 = vpop.f32.mrf.mxu0
  %v301 = vadd.f32 0.0, %v300
  %302 = vdwg.mxu0
  %v303 = vmul.f32 %v124, 0.023809524
  %v304 = vmul.f32 %v127, 0.023809524
  %v305 = vmul.f32 %v130, 0.023809524
  %v306 = vmul.f32 %v133, 0.023809524
  %v307 = vmul.f32 %v136, 0.023809524
  %v308 = vmul.f32 %v139, 0.023809524
  %v309 = vmul.f32 %v142, 0.023809524
  %v310 = vmul.f32 %v145, 0.023809524
  %v311 = vmul.f32 %v148, 0.023809524
  %v312 = vmul.f32 %v151, 0.023809524
  %v313 = vmul.f32 %v154, 0.023809524
  %v314 = vmul.f32 %v157, 0.023809524
  %v315 = vmul.f32 %v160, 0.023809524
  %v316 = vmul.f32 %v163, 0.023809524
  %v317 = vmul.f32 %v166, 0.023809524
  %v318 = vmul.f32 %v169, 0.023809524
  %v319 = vmul.f32 %v256, 0.023809524
  %v320 = vmul.f32 %v259, 0.023809524
  %v321 = vmul.f32 %v262, 0.023809524
  %v322 = vmul.f32 %v265, 0.023809524
  %v323 = vmul.f32 %v268, 0.023809524
  %v324 = vmul.f32 %v271, 0.023809524
  %v325 = vmul.f32 %v274, 0.023809524
  %v326 = vmul.f32 %v277, 0.023809524
  %v327 = vmul.f32 %v280, 0.023809524
  %v328 = vmul.f32 %v283, 0.023809524
  %v329 = vmul.f32 %v286, 0.023809524
  %v330 = vmul.f32 %v289, 0.023809524
  %v331 = vmul.f32 %v292, 0.023809524
  %v332 = vmul.f32 %v295, 0.023809524
  %v333 = vmul.f32 %v298, 0.023809524
  %v334 = vmul.f32 %v301, 0.023809524
  %v335 = vmul.f32 %v303, %v303
  %v336 = vmul.f32 %v304, %v304
  %v337 = vmul.f32 %v305, %v305
  %v338 = vmul.f32 %v306, %v306
  %v339 = vmul.f32 %v307, %v307
  %v340 = vmul.f32 %v308, %v308
  %v341 = vmul.f32 %v309, %v309
  %v342 = vmul.f32 %v310, %v310
  %v343 = vmul.f32 %v311, %v311
  %v344 = vmul.f32 %v312, %v312
  %v345 = vmul.f32 %v313, %v313
  %v346 = vmul.f32 %v314, %v314
  %v347 = vmul.f32 %v315, %v315
  %v348 = vmul.f32 %v316, %v316
  %v349 = vmul.f32 %v317, %v317
  %v350 = vmul.f32 %v318, %v318
  %367 = vrot.lane.b32.xlu0 %v335, 64
  %v368 = vpop.permute.xlu0 %367
  %369 = vrot.lane.b32.xlu0 %v336, 64
  %v370 = vpop.permute.xlu0 %369
  %371 = vrot.lane.b32.xlu0 %v337, 64
  %v372 = vpop.permute.xlu0 %371
  %373 = vrot.lane.b32.xlu0 %v338, 64
  %v374 = vpop.permute.xlu0 %373
  %375 = vrot.lane.b32.xlu0 %v339, 64
  %v376 = vpop.permute.xlu0 %375
  %377 = vrot.lane.b32.xlu0 %v340, 64
  %v378 = vpop.permute.xlu0 %377
  %379 = vrot.lane.b32.xlu0 %v341, 64
  %v380 = vpop.permute.xlu0 %379
  %381 = vrot.lane.b32.xlu0 %v342, 64
  %v382 = vpop.permute.xlu0 %381
  %383 = vrot.lane.b32.xlu0 %v343, 64
  %v384 = vpop.permute.xlu0 %383
  %385 = vrot.lane.b32.xlu0 %v344, 64
  %v386 = vpop.permute.xlu0 %385
  %387 = vrot.lane.b32.xlu0 %v345, 64
  %v388 = vpop.permute.xlu0 %387
  %389 = vrot.lane.b32.xlu0 %v346, 64
  %v390 = vpop.permute.xlu0 %389
  %391 = vrot.lane.b32.xlu0 %v347, 64
  %v392 = vpop.permute.xlu0 %391
  %393 = vrot.lane.b32.xlu0 %v348, 64
  %v394 = vpop.permute.xlu0 %393
  %395 = vrot.lane.b32.xlu0 %v349, 64
  %v396 = vpop.permute.xlu0 %395
  %397 = vrot.lane.b32.xlu0 %v350, 64
  %v398 = vpop.permute.xlu0 %397
  %v415 = vsub.f32 %v319, %v368
  %v416 = vsub.f32 %v320, %v370
  %v417 = vsub.f32 %v321, %v372
  %v418 = vsub.f32 %v322, %v374
  %v419 = vsub.f32 %v323, %v376
  %v420 = vsub.f32 %v324, %v378
  %v421 = vsub.f32 %v325, %v380
  %v422 = vsub.f32 %v326, %v382
  %v423 = vsub.f32 %v327, %v384
  %v424 = vsub.f32 %v328, %v386
  %v425 = vsub.f32 %v329, %v388
  %v426 = vsub.f32 %v330, %v390
  %v427 = vsub.f32 %v331, %v392
  %v428 = vsub.f32 %v332, %v394
  %v429 = vsub.f32 %v333, %v396
  %v430 = vsub.f32 %v334, %v398
  %v431 = vmax.f32 %v415, 0.0
  %v432 = vmax.f32 %v416, 0.0
  %v433 = vmax.f32 %v417, 0.0
  %v434 = vmax.f32 %v418, 0.0
  %v435 = vmax.f32 %v419, 0.0
  %v436 = vmax.f32 %v420, 0.0
  %v437 = vmax.f32 %v421, 0.0
  %v438 = vmax.f32 %v422, 0.0
  %v439 = vmax.f32 %v423, 0.0
  %v440 = vmax.f32 %v424, 0.0
  %v441 = vmax.f32 %v425, 0.0
  %v442 = vmax.f32 %v426, 0.0
  %v443 = vmax.f32 %v427, 0.0
  %v444 = vmax.f32 %v428, 0.0
  %v445 = vmax.f32 %v429, 0.0
  %v446 = vmax.f32 %v430, 0.0
  %v447 = vadd.f32 %v431, 1e-05
  %v448 = vadd.f32 %v432, 1e-05
  %v449 = vadd.f32 %v433, 1e-05
  %v450 = vadd.f32 %v434, 1e-05
  %v451 = vadd.f32 %v435, 1e-05
  %v452 = vadd.f32 %v436, 1e-05
  %v453 = vadd.f32 %v437, 1e-05
  %v454 = vadd.f32 %v438, 1e-05
  %v455 = vadd.f32 %v439, 1e-05
  %v456 = vadd.f32 %v440, 1e-05
  %v457 = vadd.f32 %v441, 1e-05
  %v458 = vadd.f32 %v442, 1e-05
  %v459 = vadd.f32 %v443, 1e-05
  %v460 = vadd.f32 %v444, 1e-05
  %v461 = vadd.f32 %v445, 1e-05
  %v462 = vadd.f32 %v446, 1e-05
  %v463 = vrsqrt.pop %v447
  %v464 = vmul.f32 %v463, %v447
  %v465 = vmul.f32 %v464, %v463
  %v466 = vmul.f32 0.5, %v465
  %v467 = vsub.f32 1.5, %v466
  %v468 = vmul.f32 %v463, %v467
  %vm469 = vweird.f32 %v447
  %vm470 = vweird.f32 %v463
  %vm471 = vmor %vm469, %vm470
  %v472 = vsel %vm471, %v463, %v468
  %v473 = vrsqrt.pop %v448
  %v474 = vmul.f32 %v473, %v448
  %v475 = vmul.f32 %v474, %v473
  %v476 = vmul.f32 0.5, %v475
  %v477 = vsub.f32 1.5, %v476
  %v478 = vmul.f32 %v473, %v477
  %vm479 = vweird.f32 %v448
  %vm480 = vweird.f32 %v473
  %vm481 = vmor %vm479, %vm480
  %v482 = vsel %vm481, %v473, %v478
  %v483 = vrsqrt.pop %v449
  %v484 = vmul.f32 %v483, %v449
  %v485 = vmul.f32 %v484, %v483
  %v486 = vmul.f32 0.5, %v485
  %v487 = vsub.f32 1.5, %v486
  %v488 = vmul.f32 %v483, %v487
  %vm489 = vweird.f32 %v449
  %vm490 = vweird.f32 %v483
  %vm491 = vmor %vm489, %vm490
  %v492 = vsel %vm491, %v483, %v488
  %v493 = vrsqrt.pop %v450
  %v494 = vmul.f32 %v493, %v450
  %v495 = vmul.f32 %v494, %v493
  %v496 = vmul.f32 0.5, %v495
  %v497 = vsub.f32 1.5, %v496
  %v498 = vmul.f32 %v493, %v497
  %vm499 = vweird.f32 %v450
  %vm500 = vweird.f32 %v493
  %vm501 = vmor %vm499, %vm500
  %v502 = vsel %vm501, %v493, %v498
  %v503 = vrsqrt.pop %v451
  %v504 = vmul.f32 %v503, %v451
  %v505 = vmul.f32 %v504, %v503
  %v506 = vmul.f32 0.5, %v505
  %v507 = vsub.f32 1.5, %v506
  %v508 = vmul.f32 %v503, %v507
  %vm509 = vweird.f32 %v451
  %vm510 = vweird.f32 %v503
  %vm511 = vmor %vm509, %vm510
  %v512 = vsel %vm511, %v503, %v508
  %v513 = vrsqrt.pop %v452
  %v514 = vmul.f32 %v513, %v452
  %v515 = vmul.f32 %v514, %v513
  %v516 = vmul.f32 0.5, %v515
  %v517 = vsub.f32 1.5, %v516
  %v518 = vmul.f32 %v513, %v517
  %vm519 = vweird.f32 %v452
  %vm520 = vweird.f32 %v513
  %vm521 = vmor %vm519, %vm520
  %v522 = vsel %vm521, %v513, %v518
  %v523 = vrsqrt.pop %v453
  %v524 = vmul.f32 %v523, %v453
  %v525 = vmul.f32 %v524, %v523
  %v526 = vmul.f32 0.5, %v525
  %v527 = vsub.f32 1.5, %v526
  %v528 = vmul.f32 %v523, %v527
  %vm529 = vweird.f32 %v453
  %vm530 = vweird.f32 %v523
  %vm531 = vmor %vm529, %vm530
  %v532 = vsel %vm531, %v523, %v528
  %v533 = vrsqrt.pop %v454
  %v534 = vmul.f32 %v533, %v454
  %v535 = vmul.f32 %v534, %v533
  %v536 = vmul.f32 0.5, %v535
  %v537 = vsub.f32 1.5, %v536
  %v538 = vmul.f32 %v533, %v537
  %vm539 = vweird.f32 %v454
  %vm540 = vweird.f32 %v533
  %vm541 = vmor %vm539, %vm540
  %v542 = vsel %vm541, %v533, %v538
  %v543 = vrsqrt.pop %v455
  %v544 = vmul.f32 %v543, %v455
  %v545 = vmul.f32 %v544, %v543
  %v546 = vmul.f32 0.5, %v545
  %v547 = vsub.f32 1.5, %v546
  %v548 = vmul.f32 %v543, %v547
  %vm549 = vweird.f32 %v455
  %vm550 = vweird.f32 %v543
  %vm551 = vmor %vm549, %vm550
  %v552 = vsel %vm551, %v543, %v548
  %v553 = vrsqrt.pop %v456
  %v554 = vmul.f32 %v553, %v456
  %v555 = vmul.f32 %v554, %v553
  %v556 = vmul.f32 0.5, %v555
  %v557 = vsub.f32 1.5, %v556
  %v558 = vmul.f32 %v553, %v557
  %vm559 = vweird.f32 %v456
  %vm560 = vweird.f32 %v553
  %vm561 = vmor %vm559, %vm560
  %v562 = vsel %vm561, %v553, %v558
  %v563 = vrsqrt.pop %v457
  %v564 = vmul.f32 %v563, %v457
  %v565 = vmul.f32 %v564, %v563
  %v566 = vmul.f32 0.5, %v565
  %v567 = vsub.f32 1.5, %v566
  %v568 = vmul.f32 %v563, %v567
  %vm569 = vweird.f32 %v457
  %vm570 = vweird.f32 %v563
  %vm571 = vmor %vm569, %vm570
  %v572 = vsel %vm571, %v563, %v568
  %v573 = vrsqrt.pop %v458
  %v574 = vmul.f32 %v573, %v458
  %v575 = vmul.f32 %v574, %v573
  %v576 = vmul.f32 0.5, %v575
  %v577 = vsub.f32 1.5, %v576
  %v578 = vmul.f32 %v573, %v577
  %vm579 = vweird.f32 %v458
  %vm580 = vweird.f32 %v573
  %vm581 = vmor %vm579, %vm580
  %v582 = vsel %vm581, %v573, %v578
  %v583 = vrsqrt.pop %v459
  %v584 = vmul.f32 %v583, %v459
  %v585 = vmul.f32 %v584, %v583
  %v586 = vmul.f32 0.5, %v585
  %v587 = vsub.f32 1.5, %v586
  %v588 = vmul.f32 %v583, %v587
  %vm589 = vweird.f32 %v459
  %vm590 = vweird.f32 %v583
  %vm591 = vmor %vm589, %vm590
  %v592 = vsel %vm591, %v583, %v588
  %v593 = vrsqrt.pop %v460
  %v594 = vmul.f32 %v593, %v460
  %v595 = vmul.f32 %v594, %v593
  %v596 = vmul.f32 0.5, %v595
  %v597 = vsub.f32 1.5, %v596
  %v598 = vmul.f32 %v593, %v597
  %vm599 = vweird.f32 %v460
  %vm600 = vweird.f32 %v593
  %vm601 = vmor %vm599, %vm600
  %v602 = vsel %vm601, %v593, %v598
  %v603 = vrsqrt.pop %v461
  %v604 = vmul.f32 %v603, %v461
  %v605 = vmul.f32 %v604, %v603
  %v606 = vmul.f32 0.5, %v605
  %v607 = vsub.f32 1.5, %v606
  %v608 = vmul.f32 %v603, %v607
  %vm609 = vweird.f32 %v461
  %vm610 = vweird.f32 %v603
  %vm611 = vmor %vm609, %vm610
  %v612 = vsel %vm611, %v603, %v608
  %v613 = vrsqrt.pop %v462
  %v614 = vmul.f32 %v613, %v462
  %v615 = vmul.f32 %v614, %v613
  %v616 = vmul.f32 0.5, %v615
  %v617 = vsub.f32 1.5, %v616
  %v618 = vmul.f32 %v613, %v617
  %vm619 = vweird.f32 %v462
  %vm620 = vweird.f32 %v613
  %vm621 = vmor %vm619, %vm620
  %v622 = vsel %vm621, %v613, %v618
  %v623 = vld [vmem:[%s2] sm:$0x1]
  %625 = vset.pattern.permute.xlu0 64
  %626 = vperm.xlu0 %625, %v303
  %v627 = vpop.permute.xlu0 %626
  %630 = vset.pattern.permute.xlu0 64
  %631 = vperm.xlu0 %630, %v304
  %v632 = vpop.permute.xlu0 %631
  %635 = vset.pattern.permute.xlu0 64
  %636 = vperm.xlu0 %635, %v305
  %v637 = vpop.permute.xlu0 %636
  %640 = vset.pattern.permute.xlu0 64
  %641 = vperm.xlu0 %640, %v306
  %v642 = vpop.permute.xlu0 %641
  %645 = vset.pattern.permute.xlu0 64
  %646 = vperm.xlu0 %645, %v307
  %v647 = vpop.permute.xlu0 %646
  %650 = vset.pattern.permute.xlu0 64
  %651 = vperm.xlu0 %650, %v308
  %v652 = vpop.permute.xlu0 %651
  %655 = vset.pattern.permute.xlu0 64
  %656 = vperm.xlu0 %655, %v309
  %v657 = vpop.permute.xlu0 %656
  %660 = vset.pattern.permute.xlu0 64
  %661 = vperm.xlu0 %660, %v310
  %v662 = vpop.permute.xlu0 %661
  %665 = vset.pattern.permute.xlu0 64
  %666 = vperm.xlu0 %665, %v311
  %v667 = vpop.permute.xlu0 %666
  %670 = vset.pattern.permute.xlu0 64
  %671 = vperm.xlu0 %670, %v312
  %v672 = vpop.permute.xlu0 %671
  %675 = vset.pattern.permute.xlu0 64
  %676 = vperm.xlu0 %675, %v313
  %v677 = vpop.permute.xlu0 %676
  %680 = vset.pattern.permute.xlu0 64
  %681 = vperm.xlu0 %680, %v314
  %v682 = vpop.permute.xlu0 %681
  %685 = vset.pattern.permute.xlu0 64
  %686 = vperm.xlu0 %685, %v315
  %v687 = vpop.permute.xlu0 %686
  %690 = vset.pattern.permute.xlu0 64
  %691 = vperm.xlu0 %690, %v316
  %v692 = vpop.permute.xlu0 %691
  %695 = vset.pattern.permute.xlu0 64
  %696 = vperm.xlu0 %695, %v317
  %v697 = vpop.permute.xlu0 %696
  %700 = vset.pattern.permute.xlu0 64
  %701 = vperm.xlu0 %700, %v318
  %v702 = vpop.permute.xlu0 %701
  %v705 = vperm.slane %v623, 0
  %v707 = vmul.f32 %v627, %v705
  %v708 = vmul.f32 %v632, %v705
  %v709 = vmul.f32 %v637, %v705
  %v710 = vmul.f32 %v642, %v705
  %v711 = vmul.f32 %v647, %v705
  %v712 = vmul.f32 %v652, %v705
  %v713 = vmul.f32 %v657, %v705
  %v714 = vmul.f32 %v662, %v705
  %v715 = vmul.f32 %v667, %v705
  %v716 = vmul.f32 %v672, %v705
  %v717 = vmul.f32 %v677, %v705
  %v718 = vmul.f32 %v682, %v705
  %v719 = vmul.f32 %v687, %v705
  %v720 = vmul.f32 %v692, %v705
  %v721 = vmul.f32 %v697, %v705
  %v722 = vmul.f32 %v702, %v705
  %v723 = vsub.f32 %v124, %v707
  %v724 = vsub.f32 %v127, %v708
  %v725 = vsub.f32 %v130, %v709
  %v726 = vsub.f32 %v133, %v710
  %v727 = vsub.f32 %v136, %v711
  %v728 = vsub.f32 %v139, %v712
  %v729 = vsub.f32 %v142, %v713
  %v730 = vsub.f32 %v145, %v714
  %v731 = vsub.f32 %v148, %v715
  %v732 = vsub.f32 %v151, %v716
  %v733 = vsub.f32 %v154, %v717
  %v734 = vsub.f32 %v157, %v718
  %v735 = vsub.f32 %v160, %v719
  %v736 = vsub.f32 %v163, %v720
  %v737 = vsub.f32 %v166, %v721
  %v738 = vsub.f32 %v169, %v722
  %740 = vset.pattern.permute.xlu0 0
  %741 = vperm.xlu0 %740, %v472
  %v742 = vpop.permute.xlu0 %741
  %745 = vset.pattern.permute.xlu0 0
  %746 = vperm.xlu0 %745, %v482
  %v747 = vpop.permute.xlu0 %746
  %750 = vset.pattern.permute.xlu0 0
  %751 = vperm.xlu0 %750, %v492
  %v752 = vpop.permute.xlu0 %751
  %755 = vset.pattern.permute.xlu0 0
  %756 = vperm.xlu0 %755, %v502
  %v757 = vpop.permute.xlu0 %756
  %760 = vset.pattern.permute.xlu0 0
  %761 = vperm.xlu0 %760, %v512
  %v762 = vpop.permute.xlu0 %761
  %765 = vset.pattern.permute.xlu0 0
  %766 = vperm.xlu0 %765, %v522
  %v767 = vpop.permute.xlu0 %766
  %770 = vset.pattern.permute.xlu0 0
  %771 = vperm.xlu0 %770, %v532
  %v772 = vpop.permute.xlu0 %771
  %775 = vset.pattern.permute.xlu0 0
  %776 = vperm.xlu0 %775, %v542
  %v777 = vpop.permute.xlu0 %776
  %780 = vset.pattern.permute.xlu0 0
  %781 = vperm.xlu0 %780, %v552
  %v782 = vpop.permute.xlu0 %781
  %785 = vset.pattern.permute.xlu0 0
  %786 = vperm.xlu0 %785, %v562
  %v787 = vpop.permute.xlu0 %786
  %790 = vset.pattern.permute.xlu0 0
  %791 = vperm.xlu0 %790, %v572
  %v792 = vpop.permute.xlu0 %791
  %795 = vset.pattern.permute.xlu0 0
  %796 = vperm.xlu0 %795, %v582
  %v797 = vpop.permute.xlu0 %796
  %800 = vset.pattern.permute.xlu0 0
  %801 = vperm.xlu0 %800, %v592
  %v802 = vpop.permute.xlu0 %801
  %805 = vset.pattern.permute.xlu0 0
  %806 = vperm.xlu0 %805, %v602
  %v807 = vpop.permute.xlu0 %806
  %810 = vset.pattern.permute.xlu0 0
  %811 = vperm.xlu0 %810, %v612
  %v812 = vpop.permute.xlu0 %811
  %815 = vset.pattern.permute.xlu0 0
  %816 = vperm.xlu0 %815, %v622
  %v817 = vpop.permute.xlu0 %816
  %v819 = vmul.f32 %v742, %v723
  %v820 = vmul.f32 %v747, %v724
  %v821 = vmul.f32 %v752, %v725
  %v822 = vmul.f32 %v757, %v726
  %v823 = vmul.f32 %v762, %v727
  %v824 = vmul.f32 %v767, %v728
  %v825 = vmul.f32 %v772, %v729
  %v826 = vmul.f32 %v777, %v730
  %v827 = vmul.f32 %v782, %v731
  %v828 = vmul.f32 %v787, %v732
  %v829 = vmul.f32 %v792, %v733
  %v830 = vmul.f32 %v797, %v734
  %v831 = vmul.f32 %v802, %v735
  %v832 = vmul.f32 %v807, %v736
  %v833 = vmul.f32 %v812, %v737
  %v834 = vmul.f32 %v817, %v738
  %v835 = vld [vmem:[%s3] sm:$0x1]
  %v837 = vperm.slane %v835, 0
  %v839 = vadd.f32 %v819, %v837
  %v840 = vadd.f32 %v820, %v837
  %v841 = vadd.f32 %v821, %v837
  %v842 = vadd.f32 %v822, %v837
  %v843 = vadd.f32 %v823, %v837
  %v844 = vadd.f32 %v824, %v837
  %v845 = vadd.f32 %v825, %v837
  %v846 = vadd.f32 %v826, %v837
  %v847 = vadd.f32 %v827, %v837
  %v848 = vadd.f32 %v828, %v837
  %v849 = vadd.f32 %v829, %v837
  %v850 = vadd.f32 %v830, %v837
  %v851 = vadd.f32 %v831, %v837
  %v852 = vadd.f32 %v832, %v837
  %v853 = vadd.f32 %v833, %v837
  %v854 = vadd.f32 %v834, %v837
  %v855 = vmax.f32 %v839, 0.0
  %v856 = vmax.f32 %v840, 0.0
  %v857 = vmax.f32 %v841, 0.0
  %v858 = vmax.f32 %v842, 0.0
  %v859 = vmax.f32 %v843, 0.0
  %v860 = vmax.f32 %v844, 0.0
  %v861 = vmax.f32 %v845, 0.0
  %v862 = vmax.f32 %v846, 0.0
  %v863 = vmax.f32 %v847, 0.0
  %v864 = vmax.f32 %v848, 0.0
  %v865 = vmax.f32 %v849, 0.0
  %v866 = vmax.f32 %v850, 0.0
  %v867 = vmax.f32 %v851, 0.0
  %v868 = vmax.f32 %v852, 0.0
  %v869 = vmax.f32 %v853, 0.0
  %v870 = vmax.f32 %v854, 0.0
  %v871 = vld [vmem:[%s4] sm:$0xff]
  %v872 = vld [vmem:[%s4 + $0x8] sm:$0xff]
  %v873 = vld [vmem:[%s4 + $0x10] sm:$0xff]
  %v874 = vld [vmem:[%s4 + $0x18] sm:$0xff]
  %v875 = vld [vmem:[%s4 + $0x20] sm:$0xff]
  %v876 = vld [vmem:[%s4 + $0x28] sm:$0xff]
  %v877 = vld [vmem:[%s4 + $0x30] sm:$0xff]
  %v878 = vld [vmem:[%s4 + $0x38] sm:$0xff]
  %v879 = vld [vmem:[%s5] sm:$0x1]
  %v881 = vperm.slane %v879, 0
  %vm883 = vcmask 523264
  %v885 = vsel %vm883, %v855, 0
  %v888 = vsel %vm883, %v856, 0
  %v891 = vsel %vm883, %v857, 0
  %v894 = vsel %vm883, %v858, 0
  %v897 = vsel %vm883, %v859, 0
  %v900 = vsel %vm883, %v860, 0
  %v903 = vsel %vm883, %v861, 0
  %v906 = vsel %vm883, %v862, 0
  %v909 = vsel %vm883, %v863, 0
  %v912 = vsel %vm883, %v864, 0
  %v915 = vsel %vm883, %v865, 0
  %v918 = vsel %vm883, %v866, 0
  %v921 = vsel %vm883, %v867, 0
  %v924 = vsel %vm883, %v868, 0
  %v927 = vsel %vm883, %v869, 0
  %v930 = vsel %vm883, %v870, 0
  %932 = vmatpush.msra.mxu0 0.0
  %933 = vmatpush.msra.mxu0 0.0
  %934 = vmatpush.msra.mxu0 0.0
  %935 = vmatpush.msra.mxu0 0.0
  %936 = vmatpush.msra.mxu0 0.0
  %937 = vmatpush.msra.mxu0 0.0
  %938 = vmatpush.msra.mxu0 0.0
  %939 = vmatpush.msra.mxu0 0.0
  %940 = vmatpush.msra.mxu0 %v878
  %941 = vmatpush.msra.mxu0 %v877
  %942 = vmatpush.msra.mxu0 %v876
  %943 = vmatpush.msra.mxu0 %v875
  %944 = vmatpush.msra.mxu0 %v874
  %945 = vmatpush.msra.mxu0 %v873
  %946 = vmatpush.msra.mxu0 %v872
  %947 = vmatpush.msra.mxu0 %v871
  %948 = vmatmul.f32.gmra.mxu0 %v885
  %v949 = vpop.f32.mrf.mxu0
  %v950 = vadd.f32 %v881, %v949
  %951 = vmatmul.f32.gmra.mxu0 %v888
  %v952 = vpop.f32.mrf.mxu0
  %v953 = vadd.f32 %v881, %v952
  %954 = vmatmul.f32.gmra.mxu0 %v891
  %v955 = vpop.f32.mrf.mxu0
  %v956 = vadd.f32 %v881, %v955
  %957 = vmatmul.f32.gmra.mxu0 %v894
  %v958 = vpop.f32.mrf.mxu0
  %v959 = vadd.f32 %v881, %v958
  %960 = vmatmul.f32.gmra.mxu0 %v897
  %v961 = vpop.f32.mrf.mxu0
  %v962 = vadd.f32 %v881, %v961
  %963 = vmatmul.f32.gmra.mxu0 %v900
  %v964 = vpop.f32.mrf.mxu0
  %v965 = vadd.f32 %v881, %v964
  %966 = vmatmul.f32.gmra.mxu0 %v903
  %v967 = vpop.f32.mrf.mxu0
  %v968 = vadd.f32 %v881, %v967
  %969 = vmatmul.f32.gmra.mxu0 %v906
  %v970 = vpop.f32.mrf.mxu0
  %v971 = vadd.f32 %v881, %v970
  %972 = vmatmul.f32.gmra.mxu0 %v909
  %v973 = vpop.f32.mrf.mxu0
  %v974 = vadd.f32 %v881, %v973
  %975 = vmatmul.f32.gmra.mxu0 %v912
  %v976 = vpop.f32.mrf.mxu0
  %v977 = vadd.f32 %v881, %v976
  %978 = vmatmul.f32.gmra.mxu0 %v915
  %v979 = vpop.f32.mrf.mxu0
  %v980 = vadd.f32 %v881, %v979
  %981 = vmatmul.f32.gmra.mxu0 %v918
  %v982 = vpop.f32.mrf.mxu0
  %v983 = vadd.f32 %v881, %v982
  %984 = vmatmul.f32.gmra.mxu0 %v921
  %v985 = vpop.f32.mrf.mxu0
  %v986 = vadd.f32 %v881, %v985
  %987 = vmatmul.f32.gmra.mxu0 %v924
  %v988 = vpop.f32.mrf.mxu0
  %v989 = vadd.f32 %v881, %v988
  %990 = vmatmul.f32.gmra.mxu0 %v927
  %v991 = vpop.f32.mrf.mxu0
  %v992 = vadd.f32 %v881, %v991
  %993 = vmatmul.f32.gmra.mxu0 %v930
  %v994 = vpop.f32.mrf.mxu0
  %v995 = vadd.f32 %v881, %v994
  %996 = vdwg.mxu0
  %v997 = vmax.f32 %v950, 0.0
  %v998 = vmax.f32 %v953, 0.0
  %v999 = vmax.f32 %v956, 0.0
  %v1000 = vmax.f32 %v959, 0.0
  %v1001 = vmax.f32 %v962, 0.0
  %v1002 = vmax.f32 %v965, 0.0
  %v1003 = vmax.f32 %v968, 0.0
  %v1004 = vmax.f32 %v971, 0.0
  %v1005 = vmax.f32 %v974, 0.0
  %v1006 = vmax.f32 %v977, 0.0
  %v1007 = vmax.f32 %v980, 0.0
  %v1008 = vmax.f32 %v983, 0.0
  %v1009 = vmax.f32 %v986, 0.0
  %v1010 = vmax.f32 %v989, 0.0
  %v1011 = vmax.f32 %v992, 0.0
  %v1012 = vmax.f32 %v995, 0.0
  %v1013 = vld [vmem:[%s6] sm:$0xff]
  %v1014 = vld [vmem:[%s6 + $0x8] sm:$0xff]
  %v1015 = vld [vmem:[%s6 + $0x10] sm:$0xff]
  %v1016 = vld [vmem:[%s6 + $0x18] sm:$0xff]
  %v1017 = vld [vmem:[#allocation2] sm:$0x1]
  %v1019 = vperm.slane %v1017, 0
  %vm1021 = vcmask 261120
  %v1023 = vsel %vm1021, %v997, 0
  %v1026 = vsel %vm1021, %v998, 0
  %v1029 = vsel %vm1021, %v999, 0
  %v1032 = vsel %vm1021, %v1000, 0
  %v1035 = vsel %vm1021, %v1001, 0
  %v1038 = vsel %vm1021, %v1002, 0
  %v1041 = vsel %vm1021, %v1003, 0
  %v1044 = vsel %vm1021, %v1004, 0
  %v1047 = vsel %vm1021, %v1005, 0
  %v1050 = vsel %vm1021, %v1006, 0
  %v1053 = vsel %vm1021, %v1007, 0
  %v1056 = vsel %vm1021, %v1008, 0
  %v1059 = vsel %vm1021, %v1009, 0
  %v1062 = vsel %vm1021, %v1010, 0
  %v1065 = vsel %vm1021, %v1011, 0
  %v1068 = vsel %vm1021, %v1012, 0
  %1070 = vmatpush.msra.mxu0 0.0
  %1071 = vmatpush.msra.mxu0 0.0
  %1072 = vmatpush.msra.mxu0 0.0
  %1073 = vmatpush.msra.mxu0 0.0
  %1074 = vmatpush.msra.mxu0 0.0
  %1075 = vmatpush.msra.mxu0 0.0
  %1076 = vmatpush.msra.mxu0 0.0
  %1077 = vmatpush.msra.mxu0 0.0
  %1078 = vmatpush.msra.mxu0 0.0
  %1079 = vmatpush.msra.mxu0 0.0
  %1080 = vmatpush.msra.mxu0 0.0
  %1081 = vmatpush.msra.mxu0 0.0
  %1082 = vmatpush.msra.mxu0 %v1016
  %1083 = vmatpush.msra.mxu0 %v1015
  %1084 = vmatpush.msra.mxu0 %v1014
  %1085 = vmatpush.msra.mxu0 %v1013
  %1086 = vmatmul.f32.gmra.mxu0 %v1023
  %v1087 = vpop.f32.mrf.mxu0
  %v1088 = vadd.f32 %v1019, %v1087
  %1089 = vmatmul.f32.gmra.mxu0 %v1026
  %v1090 = vpop.f32.mrf.mxu0
  %v1091 = vadd.f32 %v1019, %v1090
  %1092 = vmatmul.f32.gmra.mxu0 %v1029
  %v1093 = vpop.f32.mrf.mxu0
  %v1094 = vadd.f32 %v1019, %v1093
  %1095 = vmatmul.f32.gmra.mxu0 %v1032
  %v1096 = vpop.f32.mrf.mxu0
  %v1097 = vadd.f32 %v1019, %v1096
  %1098 = vmatmul.f32.gmra.mxu0 %v1035
  %v1099 = vpop.f32.mrf.mxu0
  %v1100 = vadd.f32 %v1019, %v1099
  %1101 = vmatmul.f32.gmra.mxu0 %v1038
  %v1102 = vpop.f32.mrf.mxu0
  %v1103 = vadd.f32 %v1019, %v1102
  %1104 = vmatmul.f32.gmra.mxu0 %v1041
  %v1105 = vpop.f32.mrf.mxu0
  %v1106 = vadd.f32 %v1019, %v1105
  %1107 = vmatmul.f32.gmra.mxu0 %v1044
  %v1108 = vpop.f32.mrf.mxu0
  %v1109 = vadd.f32 %v1019, %v1108
  %1110 = vmatmul.f32.gmra.mxu0 %v1047
  %v1111 = vpop.f32.mrf.mxu0
  %v1112 = vadd.f32 %v1019, %v1111
  %1113 = vmatmul.f32.gmra.mxu0 %v1050
  %v1114 = vpop.f32.mrf.mxu0
  %v1115 = vadd.f32 %v1019, %v1114
  %1116 = vmatmul.f32.gmra.mxu0 %v1053
  %v1117 = vpop.f32.mrf.mxu0
  %v1118 = vadd.f32 %v1019, %v1117
  %1119 = vmatmul.f32.gmra.mxu0 %v1056
  %v1120 = vpop.f32.mrf.mxu0
  %v1121 = vadd.f32 %v1019, %v1120
  %1122 = vmatmul.f32.gmra.mxu0 %v1059
  %v1123 = vpop.f32.mrf.mxu0
  %v1124 = vadd.f32 %v1019, %v1123
  %1125 = vmatmul.f32.gmra.mxu0 %v1062
  %v1126 = vpop.f32.mrf.mxu0
  %v1127 = vadd.f32 %v1019, %v1126
  %1128 = vmatmul.f32.gmra.mxu0 %v1065
  %v1129 = vpop.f32.mrf.mxu0
  %v1130 = vadd.f32 %v1019, %v1129
  %1131 = vmatmul.f32.gmra.mxu0 %v1068
  %v1132 = vpop.f32.mrf.mxu0
  %v1133 = vadd.f32 %v1019, %v1132
  %1134 = vdwg.mxu0
  %vm1135 = vcmask 7168
  %1136 = vst.msk [vmem:[%s8] sm:$0xff] %vm1135, %v1088
  %1137 = vst.msk [vmem:[%s8 + $0x8] sm:$0xff] %vm1135, %v1091
  %1138 = vst.msk [vmem:[%s8 + $0x10] sm:$0xff] %vm1135, %v1094
  %1139 = vst.msk [vmem:[%s8 + $0x18] sm:$0xff] %vm1135, %v1097
  %1140 = vst.msk [vmem:[%s8 + $0x20] sm:$0xff] %vm1135, %v1100
  %1141 = vst.msk [vmem:[%s8 + $0x28] sm:$0xff] %vm1135, %v1103
  %1142 = vst.msk [vmem:[%s8 + $0x30] sm:$0xff] %vm1135, %v1106
  %1143 = vst.msk [vmem:[%s8 + $0x38] sm:$0xff] %vm1135, %v1109
  %1144 = vst.msk [vmem:[%s8 + $0x40] sm:$0xff] %vm1135, %v1112
  %1145 = vst.msk [vmem:[%s8 + $0x48] sm:$0xff] %vm1135, %v1115
  %1146 = vst.msk [vmem:[%s8 + $0x50] sm:$0xff] %vm1135, %v1118
  %1147 = vst.msk [vmem:[%s8 + $0x58] sm:$0xff] %vm1135, %v1121
  %1148 = vst.msk [vmem:[%s8 + $0x60] sm:$0xff] %vm1135, %v1124
  %1149 = vst.msk [vmem:[%s8 + $0x68] sm:$0xff] %vm1135, %v1127
  %1150 = vst.msk [vmem:[%s8 + $0x70] sm:$0xff] %vm1135, %v1130
  %1151 = vst.msk [vmem:[%s8 + $0x78] sm:$0xff] %vm1135, %v1133
  // Predicated region
  $region34: #{tpu_custom_call.1} parent=0 // pred_check
    _
  $region35: #{tpu_custom_call.1} parent=0 // pred_check_branch
    %1153 = sbr.rel (0) target = $region37
  $region36: #{tpu_custom_call.1} parent=0 // pred_region
    _
  $region37: #{tpu_custom_call.1} parent=0 // pred_fallthru
    _
  // Predicated region
  $region38: #{tpu_custom_call.1} parent=0 // pred_check
    _
  $region39: #{tpu_custom_call.1} parent=0 // pred_check_branch
    %1155 = sbr.rel (0) target = $region41
  $region40: #{tpu_custom_call.1} parent=0 // pred_region
    _
  $region41: #{tpu_custom_call.1} parent=0 // pred_fallthru
    _

</llo_original>
